<compile_context>
chip_gen: v7x
topology: tpu7x:2x2x1
jax: 0.10.0
libtpu: 0.0.40
codegen_flags: <defaults>
</compile_context>

<pallas_src>
import jax
import jax.numpy as jnp
from jax.experimental import pallas as pl
from jax.experimental.pallas import tpu as pltpu


# ---------------------------------------------------------------------------
# Kernel
# ---------------------------------------------------------------------------
def _double_q_kernel(
    state_ref, action_ref,
    w1s_ref, w1a_ref, b1_ref,
    w21_ref, w22_ref, b2_ref,
    w31_ref, w32_ref, b3_ref,
    q_ref,
):
    H = w21_ref.shape[0]

    # --- layer 1 (+ fused state/action concat) + relu -> (tile_b, 2H) --------
    h = jnp.dot(state_ref[...], w1s_ref[...], preferred_element_type=jnp.float32)
    h = h + jnp.dot(action_ref[...], w1a_ref[...], preferred_element_type=jnp.float32)
    h = jnp.maximum(h + b1_ref[...], 0.0)

    # --- split heads (lane-aligned when H % 128 == 0) -------------------------
    h1 = h[:, :H]
    h2 = h[:, H:]
    b2 = b2_ref[...]

    # --- layer 2 per head (full-density matmuls, no block-diag zeros) + relu --
    g1 = jnp.maximum(
        jnp.dot(h1, w21_ref[...], preferred_element_type=jnp.float32) + b2[:, :H], 0.0)
    g2 = jnp.maximum(
        jnp.dot(h2, w22_ref[...], preferred_element_type=jnp.float32) + b2[:, H:], 0.0)

    # --- output projections -> packed (tile_b, 2): col 0 = q1, col 1 = q2 -----
    q1 = jnp.dot(g1, w31_ref[...], preferred_element_type=jnp.float32)
    q2 = jnp.dot(g2, w32_ref[...], preferred_element_type=jnp.float32)
    q_ref[...] = jnp.concatenate([q1, q2], axis=1) + b3_ref[...]


# ---------------------------------------------------------------------------
# Wrapper
# ---------------------------------------------------------------------------
def double_q_forward(state, action, packed_params, *, tile_b=None):
    """Pallas-backed forward.

    state : (B, num_obs) or (T, B, num_obs)         float32
    action: (B, num_actions) or (T, B, num_actions) float32
    Returns (q1, q2), each (..., 1) float32.
    """
    w1s, w1a, b1, w21, w22, b2, w31, w32, b3 = packed_params

    orig_ndim = state.ndim
    if orig_ndim == 3:                     # (T, B, feat) branch of the module
        lead = state.shape[:2]
        state = state.reshape(-1, state.shape[-1])
        action = action.reshape(-1, action.shape[-1])

    B, num_obs = state.shape
    num_actions = action.shape[1]

    # Batch tile: whole batch for small B, otherwise a multiple of 8 that
    # divides B (per-step activations stay tiny vs. v7x's 64 MiB VMEM).
    if tile_b is None:
        tile_b = min(B, 1024)
    if B % tile_b != 0 or (tile_b != B and tile_b % 8 != 0):
        tile_b = B
    grid = (B // tile_b,)

    batch_map = lambda i: (i, 0)   # tile the batch axis
    const_map = lambda i: (0, 0)   # weights stay VMEM-resident across steps

    in_specs = [
        pl.BlockSpec((tile_b, num_obs), batch_map),
        pl.BlockSpec((tile_b, num_actions), batch_map),
    ] + [
        pl.BlockSpec(w.shape, const_map)
        for w in (w1s, w1a, b1, w21, w22, b2, w31, w32, b3)
    ]
    out_spec = pl.BlockSpec((tile_b, 2), batch_map)

    q = pl.pallas_call(
        _double_q_kernel,
        out_shape=jax.ShapeDtypeStruct((B, 2), jnp.float32),
        grid=grid,
        in_specs=in_specs,
        out_specs=out_spec,
        compiler_params=pltpu.CompilerParams(
            dimension_semantics=("parallel",),
        ),
    )(state, action, w1s, w1a, b1, w21, w22, b2, w31, w32, b3)

    q1, q2 = q[:, 0:1], q[:, 1:2]
    if orig_ndim == 3:
        q1 = q1.reshape(*lead, 1)
        q2 = q2.reshape(*lead, 1)
    return q1, q2


# ---------------------------------------------------------------------------
# Parameters: per-head init (matches the PyTorch module layout) + packing
# ---------------------------------------------------------------------------
def init_params(key, num_obs, num_actions, hidden_dim):
    """Per-head parameters (xavier-uniform weights, zero biases).

    Weights are stored as (in_features, out_features) so x @ W + b matches
    PyTorch's x @ W.T + b with W (out, in).
    """
    num_in = num_obs + num_actions

    def xavier(k, fan_in, fan_out):
        limit = jnp.sqrt(6.0 / (fan_in + fan_out))
        return jax.random.uniform(k, (fan_in, fan_out), jnp.float32,
                                  minval=-limit, maxval=limit)

    keys = jax.random.split(key, 6)
    # Head 1 (q1_base + q1_out_layer)
    w1_h1 = xavier(keys[0], num_in, hidden_dim)
    b1_h1 = jnp.zeros((1, hidden_dim), jnp.float32)
    w2_h1 = xavier(keys[1], hidden_dim, hidden_dim)
    b2_h1 = jnp.zeros((1, hidden_dim), jnp.float32)
    w3_h1 = xavier(keys[2], hidden_dim, 1)
    b3_h1 = jnp.zeros((1, 1), jnp.float32)
    # Head 2 (q2_base + q2_out_layer)
    w1_h2 = xavier(keys[3], num_in, hidden_dim)
    b1_h2 = jnp.zeros((1, hidden_dim), jnp.float32)
    w2_h2 = xavier(keys[4], hidden_dim, hidden_dim)
    b2_h2 = jnp.zeros((1, hidden_dim), jnp.float32)
    w3_h2 = xavier(keys[5], hidden_dim, 1)
    b3_h2 = jnp.zeros((1, 1), jnp.float32)

    return (w1_h1, b1_h1, w2_h1, b2_h1, w3_h1, b3_h1,
            w1_h2, b1_h2, w2_h2, b2_h2, w3_h2, b3_h2)


def pack_params(per_head_params, num_obs, num_actions, hidden_dim):
    """Pack both heads into the fused operand set used by the kernel."""
    (w1_h1, b1_h1, w2_h1, b2_h1, w3_h1, b3_h1,
     w1_h2, b1_h2, w2_h2, b2_h2, w3_h2, b3_h2) = per_head_params

    # Split W1 rows into (state, action) and pack both heads along columns.
    w1s = jnp.concatenate([w1_h1[:num_obs], w1_h2[:num_obs]], axis=1)   # (num_obs, 2H)
    w1a = jnp.concatenate([w1_h1[num_obs:], w1_h2[num_obs:]], axis=1)   # (num_actions, 2H)
    b1 = jnp.concatenate([b1_h1, b1_h2], axis=1)                        # (1, 2H)

    # Layer-2 / layer-3 weights stay per head (full-density matmuls in-kernel).
    b2 = jnp.concatenate([b2_h1, b2_h2], axis=1)                        # (1, 2H)
    b3 = jnp.concatenate([b3_h1, b3_h2], axis=1)                        # (1, 2)

    return (w1s, w1a, b1, w2_h1, w2_h2, b2, w3_h1, w3_h2, b3)


# ---------------------------------------------------------------------------
# Pure-JAX reference mirroring the PyTorch module (un-packed params)
# ---------------------------------------------------------------------------
def reference_forward(state, action, per_head_params):
    (w1_h1, b1_h1, w2_h1, b2_h1, w3_h1, b3_h1,
     w1_h2, b1_h2, w2_h2, b2_h2, w3_h2, b3_h2) = per_head_params
    xu = jnp.concatenate([state, action], axis=-1)

    def head(w1, b1, w2, b2, w3, b3):
        h = jax.nn.relu(xu @ w1 + b1)
        h = jax.nn.relu(h @ w2 + b2)
        h = jax.nn.relu(h)          # outer relu in MujocoDoubleQNetwork.forward
        return h @ w3 + b3

    return (head(w1_h1, b1_h1, w2_h1, b2_h1, w3_h1, b3_h1),
            head(w1_h2, b1_h2, w2_h2, b2_h2, w3_h2, b3_h2))


# ---------------------------------------------------------------------------
# Demo / correctness check
# ---------------------------------------------------------------------------
if __name__ == "__main__":
    B, NUM_OBS, NUM_ACTIONS, HIDDEN = 8, 12, 4, 32

    key = jax.random.PRNGKey(0)
    k_state, k_action, k_params, k_s3, k_a3 = jax.random.split(key, 5)

    state = jax.random.normal(k_state, (B, NUM_OBS), jnp.float32)
    action = jax.random.normal(k_action, (B, NUM_ACTIONS), jnp.float32)

    per_head_params = init_params(k_params, NUM_OBS, NUM_ACTIONS, HIDDEN)
    packed_params = pack_params(per_head_params, NUM_OBS, NUM_ACTIONS, HIDDEN)

    # 2-D batch path
    q1, q2 = double_q_forward(state, action, packed_params)
    q1 = jax.block_until_ready(q1)
    q2 = jax.block_until_ready(q2)

    r1, r2 = reference_forward(state, action, per_head_params)
    assert q1.shape == (B, 1) and q2.shape == (B, 1)
    assert jnp.allclose(q1, r1, atol=1e-5, rtol=1e-5)
    assert jnp.allclose(q2, r2, atol=1e-5, rtol=1e-5)

    # 3-D (T, B, feat) path (the len(state.shape) == 3 branch of the module)
    T, B2 = 3, 4
    state3 = jax.random.normal(k_s3, (T, B2, NUM_OBS), jnp.float32)
    action3 = jax.random.normal(k_a3, (T, B2, NUM_ACTIONS), jnp.float32)
    q1_3, q2_3 = double_q_forward(state3, action3, packed_params)
    q1_3 = jax.block_until_ready(q1_3)
    q2_3 = jax.block_until_ready(q2_3)
    r1_3, r2_3 = reference_forward(state3.reshape(-1, NUM_OBS),
                                   action3.reshape(-1, NUM_ACTIONS),
                                   per_head_params)
    assert q1_3.shape == (T, B2, 1) and q2_3.shape == (T, B2, 1)
    assert jnp.allclose(q1_3.reshape(-1, 1), r1_3, atol=1e-5, rtol=1e-5)
    assert jnp.allclose(q2_3.reshape(-1, 1), r2_3, atol=1e-5, rtol=1e-5)

    print("KERNEL_OK")
</pallas_src>

<mosaic_0001>
module attributes {stable_mosaic.version = 11 : i64} {
  func.func @_double_q_kernel(%arg0: i32, %arg1: memref<8x12xf32, #tpu.memory_space<vmem>>, %arg2: memref<8x4xf32, #tpu.memory_space<vmem>>, %arg3: memref<12x64xf32, #tpu.memory_space<vmem>>, %arg4: memref<4x64xf32, #tpu.memory_space<vmem>>, %arg5: memref<1x64xf32, #tpu.memory_space<vmem>>, %arg6: memref<32x32xf32, #tpu.memory_space<vmem>>, %arg7: memref<32x32xf32, #tpu.memory_space<vmem>>, %arg8: memref<1x64xf32, #tpu.memory_space<vmem>>, %arg9: memref<32x1xf32, #tpu.memory_space<vmem>>, %arg10: memref<32x1xf32, #tpu.memory_space<vmem>>, %arg11: memref<1x2xf32, #tpu.memory_space<vmem>>, %arg12: memref<8x2xf32, #tpu.memory_space<vmem>>) attributes {dimension_semantics = [#tpu.dimension_semantics<parallel>], iteration_bounds = array<i64: 1>, scalar_prefetch = 0 : i64, scratch_operands = 0 : i64, tpu.core_type = #tpu.core_type<tc>, window_params = [{transform_indices = @transform_0, window_bounds = array<i64: 8, 12>}, {transform_indices = @transform_1, window_bounds = array<i64: 8, 4>}, {pipeline_mode = #tpu.pipeline_mode<synchronous>, transform_indices = @transform_2, window_bounds = array<i64: 12, 64>}, {pipeline_mode = #tpu.pipeline_mode<synchronous>, transform_indices = @transform_3, window_bounds = array<i64: 4, 64>}, {pipeline_mode = #tpu.pipeline_mode<synchronous>, transform_indices = @transform_4, window_bounds = array<i64: 1, 64>}, {pipeline_mode = #tpu.pipeline_mode<synchronous>, transform_indices = @transform_5, window_bounds = array<i64: 32, 32>}, {pipeline_mode = #tpu.pipeline_mode<synchronous>, transform_indices = @transform_6, window_bounds = array<i64: 32, 32>}, {pipeline_mode = #tpu.pipeline_mode<synchronous>, transform_indices = @transform_7, window_bounds = array<i64: 1, 64>}, {pipeline_mode = #tpu.pipeline_mode<synchronous>, transform_indices = @transform_8, window_bounds = array<i64: 32, 1>}, {pipeline_mode = #tpu.pipeline_mode<synchronous>, transform_indices = @transform_9, window_bounds = array<i64: 32, 1>}, {pipeline_mode = #tpu.pipeline_mode<synchronous>, transform_indices = @transform_10, window_bounds = array<i64: 1, 2>}, {transform_indices = @transform_11, window_bounds = array<i64: 8, 2>}]} {
    %c0 = arith.constant 0 : index
    %c0_0 = arith.constant 0 : index
    %0 = vector.load %arg1[%c0, %c0_0] : memref<8x12xf32, #tpu.memory_space<vmem>>, vector<8x12xf32>
    %c0_1 = arith.constant 0 : index
    %c0_2 = arith.constant 0 : index
    %1 = vector.load %arg3[%c0_1, %c0_2] : memref<12x64xf32, #tpu.memory_space<vmem>>, vector<12x64xf32>
    %cst = arith.constant dense<0.000000e+00> : vector<8x64xf32>
    %2 = tpu.matmul %0, %1, %cst {dimension_numbers = #tpu.dot_dimension_numbers<[1], [0], [0], [1], [0, 0, 1, 1], [], []>} : vector<8x12xf32>, vector<12x64xf32>, vector<8x64xf32> -> vector<8x64xf32>
    %c0_3 = arith.constant 0 : index
    %c0_4 = arith.constant 0 : index
    %3 = vector.load %arg2[%c0_3, %c0_4] : memref<8x4xf32, #tpu.memory_space<vmem>>, vector<8x4xf32>
    %c0_5 = arith.constant 0 : index
    %c0_6 = arith.constant 0 : index
    %4 = vector.load %arg4[%c0_5, %c0_6] : memref<4x64xf32, #tpu.memory_space<vmem>>, vector<4x64xf32>
    %cst_7 = arith.constant dense<0.000000e+00> : vector<8x64xf32>
    %5 = tpu.matmul %3, %4, %cst_7 {dimension_numbers = #tpu.dot_dimension_numbers<[1], [0], [0], [1], [0, 0, 1, 1], [], []>} : vector<8x4xf32>, vector<4x64xf32>, vector<8x64xf32> -> vector<8x64xf32>
    %6 = arith.addf %2, %5 : vector<8x64xf32>
    %c0_8 = arith.constant 0 : index
    %c0_9 = arith.constant 0 : index
    %7 = vector.load %arg5[%c0_8, %c0_9] : memref<1x64xf32, #tpu.memory_space<vmem>>, vector<1x64xf32>
    %8 = vector.broadcast %7 : vector<1x64xf32> to vector<8x64xf32>
    %9 = arith.addf %6, %8 : vector<8x64xf32>
    %cst_10 = arith.constant 0.000000e+00 : f32
    %10 = vector.broadcast %cst_10 : f32 to vector<8x64xf32>
    %11 = arith.maximumf %9, %10 : vector<8x64xf32>
    %12 = vector.extract_strided_slice %11 {offsets = [0, 0], sizes = [8, 32], strides = [1, 1]} : vector<8x64xf32> to vector<8x32xf32>
    %13 = vector.extract_strided_slice %11 {offsets = [0, 32], sizes = [8, 32], strides = [1, 1]} : vector<8x64xf32> to vector<8x32xf32>
    %c0_11 = arith.constant 0 : index
    %c0_12 = arith.constant 0 : index
    %14 = vector.load %arg8[%c0_11, %c0_12] : memref<1x64xf32, #tpu.memory_space<vmem>>, vector<1x64xf32>
    %c0_13 = arith.constant 0 : index
    %c0_14 = arith.constant 0 : index
    %15 = vector.load %arg6[%c0_13, %c0_14] : memref<32x32xf32, #tpu.memory_space<vmem>>, vector<32x32xf32>
    %cst_15 = arith.constant dense<0.000000e+00> : vector<8x32xf32>
    %16 = tpu.matmul %12, %15, %cst_15 {dimension_numbers = #tpu.dot_dimension_numbers<[1], [0], [0], [1], [0, 0, 1, 1], [], []>} : vector<8x32xf32>, vector<32x32xf32>, vector<8x32xf32> -> vector<8x32xf32>
    %17 = vector.extract_strided_slice %14 {offsets = [0, 0], sizes = [1, 32], strides = [1, 1]} : vector<1x64xf32> to vector<1x32xf32>
    %18 = vector.broadcast %17 : vector<1x32xf32> to vector<8x32xf32>
    %19 = arith.addf %16, %18 : vector<8x32xf32>
    %cst_16 = arith.constant 0.000000e+00 : f32
    %20 = vector.broadcast %cst_16 : f32 to vector<8x32xf32>
    %21 = arith.maximumf %19, %20 : vector<8x32xf32>
    %c0_17 = arith.constant 0 : index
    %c0_18 = arith.constant 0 : index
    %22 = vector.load %arg7[%c0_17, %c0_18] : memref<32x32xf32, #tpu.memory_space<vmem>>, vector<32x32xf32>
    %cst_19 = arith.constant dense<0.000000e+00> : vector<8x32xf32>
    %23 = tpu.matmul %13, %22, %cst_19 {dimension_numbers = #tpu.dot_dimension_numbers<[1], [0], [0], [1], [0, 0, 1, 1], [], []>} : vector<8x32xf32>, vector<32x32xf32>, vector<8x32xf32> -> vector<8x32xf32>
    %24 = vector.extract_strided_slice %14 {offsets = [0, 32], sizes = [1, 32], strides = [1, 1]} : vector<1x64xf32> to vector<1x32xf32>
    %25 = vector.broadcast %24 : vector<1x32xf32> to vector<8x32xf32>
    %26 = arith.addf %23, %25 : vector<8x32xf32>
    %cst_20 = arith.constant 0.000000e+00 : f32
    %27 = vector.broadcast %cst_20 : f32 to vector<8x32xf32>
    %28 = arith.maximumf %26, %27 : vector<8x32xf32>
    %c0_21 = arith.constant 0 : index
    %c0_22 = arith.constant 0 : index
    %29 = vector.load %arg9[%c0_21, %c0_22] : memref<32x1xf32, #tpu.memory_space<vmem>>, vector<32x1xf32>
    %cst_23 = arith.constant dense<0.000000e+00> : vector<8x1xf32>
    %30 = tpu.matmul %21, %29, %cst_23 {dimension_numbers = #tpu.dot_dimension_numbers<[1], [0], [0], [1], [0, 0, 1, 1], [], []>} : vector<8x32xf32>, vector<32x1xf32>, vector<8x1xf32> -> vector<8x1xf32>
    %c0_24 = arith.constant 0 : index
    %c0_25 = arith.constant 0 : index
    %31 = vector.load %arg10[%c0_24, %c0_25] : memref<32x1xf32, #tpu.memory_space<vmem>>, vector<32x1xf32>
    %cst_26 = arith.constant dense<0.000000e+00> : vector<8x1xf32>
    %32 = tpu.matmul %28, %31, %cst_26 {dimension_numbers = #tpu.dot_dimension_numbers<[1], [0], [0], [1], [0, 0, 1, 1], [], []>} : vector<8x32xf32>, vector<32x1xf32>, vector<8x1xf32> -> vector<8x1xf32>
    %33 = tpu.concatenate %30, %32 in 1 : vector<8x1xf32>, vector<8x1xf32> -> vector<8x2xf32>
    %c0_27 = arith.constant 0 : index
    %c0_28 = arith.constant 0 : index
    %34 = vector.load %arg11[%c0_27, %c0_28] : memref<1x2xf32, #tpu.memory_space<vmem>>, vector<1x2xf32>
    %35 = vector.broadcast %34 : vector<1x2xf32> to vector<8x2xf32>
    %36 = arith.addf %33, %35 : vector<8x2xf32>
    %c0_29 = arith.constant 0 : index
    %c0_30 = arith.constant 0 : index
    %37 = vector.load %arg12[%c0_29, %c0_30] : memref<8x2xf32, #tpu.memory_space<vmem>>, vector<8x2xf32>
    tpu.vector_store %arg12[%c0_29, %c0_30], %36 {strides = array<i32>} : memref<8x2xf32, #tpu.memory_space<vmem>>, vector<8x2xf32>,
    return
  }
  func.func @transform_0(%arg0: i32) -> (i32, i32) {
    %c0_i32 = arith.constant 0 : i32
    %c0_i32_0 = arith.constant 0 : i32
    return %arg0, %c0_i32 : i32, i32
  }
  func.func @transform_1(%arg0: i32) -> (i32, i32) {
    %c0_i32 = arith.constant 0 : i32
    %c0_i32_0 = arith.constant 0 : i32
    return %arg0, %c0_i32 : i32, i32
  }
  func.func @transform_2(%arg0: i32) -> (i32, i32) {
    %c0_i32 = arith.constant 0 : i32
    %c0_i32_0 = arith.constant 0 : i32
    %c0_i32_1 = arith.constant 0 : i32
    return %c0_i32, %c0_i32_0 : i32, i32
  }
  func.func @transform_3(%arg0: i32) -> (i32, i32) {
    %c0_i32 = arith.constant 0 : i32
    %c0_i32_0 = arith.constant 0 : i32
    %c0_i32_1 = arith.constant 0 : i32
    return %c0_i32, %c0_i32_0 : i32, i32
  }
  func.func @transform_4(%arg0: i32) -> (i32, i32) {
    %c0_i32 = arith.constant 0 : i32
    %c0_i32_0 = arith.constant 0 : i32
    %c0_i32_1 = arith.constant 0 : i32
    return %c0_i32, %c0_i32_0 : i32, i32
  }
  func.func @transform_5(%arg0: i32) -> (i32, i32) {
    %c0_i32 = arith.constant 0 : i32
    %c0_i32_0 = arith.constant 0 : i32
    %c0_i32_1 = arith.constant 0 : i32
    return %c0_i32, %c0_i32_0 : i32, i32
  }
  func.func @transform_6(%arg0: i32) -> (i32, i32) {
    %c0_i32 = arith.constant 0 : i32
    %c0_i32_0 = arith.constant 0 : i32
    %c0_i32_1 = arith.constant 0 : i32
    return %c0_i32, %c0_i32_0 : i32, i32
  }
  func.func @transform_7(%arg0: i32) -> (i32, i32) {
    %c0_i32 = arith.constant 0 : i32
    %c0_i32_0 = arith.constant 0 : i32
    %c0_i32_1 = arith.constant 0 : i32
    return %c0_i32, %c0_i32_0 : i32, i32
  }
  func.func @transform_8(%arg0: i32) -> (i32, i32) {
    %c0_i32 = arith.constant 0 : i32
    %c0_i32_0 = arith.constant 0 : i32
    %c0_i32_1 = arith.constant 0 : i32
    return %c0_i32, %c0_i32_0 : i32, i32
  }
  func.func @transform_9(%arg0: i32) -> (i32, i32) {
    %c0_i32 = arith.constant 0 : i32
    %c0_i32_0 = arith.constant 0 : i32
    %c0_i32_1 = arith.constant 0 : i32
    return %c0_i32, %c0_i32_0 : i32, i32
  }
  func.func @transform_10(%arg0: i32) -> (i32, i32) {
    %c0_i32 = arith.constant 0 : i32
    %c0_i32_0 = arith.constant 0 : i32
    %c0_i32_1 = arith.constant 0 : i32
    return %c0_i32, %c0_i32_0 : i32, i32
  }
  func.func @transform_11(%arg0: i32) -> (i32, i32) {
    %c0_i32 = arith.constant 0 : i32
    %c0_i32_0 = arith.constant 0 : i32
    return %arg0, %c0_i32 : i32, i32
  }
}

</mosaic_0001>

<llo_original>
// kernel: tpu_custom_call.1
$region0: #{tpu_custom_call.1}
  #allocation0 [shape = 'u32[]', space=smem, size = 0x4, offset = 0x4, fixed_abs, tag = 'smem constant byte address 0x4 - core index']
  #allocation1 [shape = 'u32[144,128]{1,0:T(1,128)}', space=vmem, size = 0x12000, scoped, tag = 'internal scratch']
  %s0 = inlined_call_operand.hbm [shape: f32[8,12], index: 0, kind: input, shape index: {}]
  %s1 = inlined_call_operand.vmem [shape: f32[8,4], index: 1, kind: input, shape index: {}]
  %s2 = inlined_call_operand.vmem [shape: f32[12,64], index: 2, kind: input, shape index: {}]
  %s3 = inlined_call_operand.vmem [shape: f32[4,64], index: 3, kind: input, shape index: {}]
  %s4 = inlined_call_operand.vmem [shape: f32[1,64], index: 4, kind: input, shape index: {}]
  %s5 = inlined_call_operand.vmem [shape: f32[32,32], index: 5, kind: input, shape index: {}]
  %s6 = inlined_call_operand.vmem [shape: f32[32,32], index: 6, kind: input, shape index: {}]
  %s7 = inlined_call_operand.vmem [shape: f32[1,64], index: 7, kind: input, shape index: {}]
  %s8 = inlined_call_operand.vmem [shape: f32[32,1], index: 8, kind: input, shape index: {}]
  %s9 = inlined_call_operand.vmem [shape: f32[32,1], index: 9, kind: input, shape index: {}]
  %s10 = inlined_call_operand.vmem [shape: f32[1,2], index: 10, kind: input, shape index: {}]
  %s11 = inlined_call_operand.vmem [shape: f32[8,2], index: 11, kind: output, shape index: {}]
  %s12 = sld [smem:[#allocation0]]
  $region58: #{tpu_custom_call.1} parent=0
    _
  %s14 = ssub.s32 1, %s12
  %s15 = scalar_select 0, %s14, %s12
  $region1: #{tpu_custom_call.1} parent=0
    #allocation2 [shape = 'u8[4096]{0}', space=vmem, size = 0x1000, scoped, tag = 'input window, operand 0, single buffered']
    #allocation3 [shape = 's32[1]{0}', space=sflag, size = 0x4, scoped, tag = 'scoped memory for tpu_custom_call.1']
    %16 = vsyncpa [#allocation3], 0
    // Predicated region
    $region2: #{tpu_custom_call.1} parent=1 // pred_check
      _
    $region3: #{tpu_custom_call.1} parent=1 // pred_check_branch
      %18 = sbr.rel (0) target = $region5
    $region4: #{tpu_custom_call.1} parent=1 // pred_region
      %s20 = ssub.s32 128, 128
      %21 = vsyncadd [#allocation3], %s20
      %s23 = sshll.u32 [#allocation2], 4
      %s24 = int_to_ptr.vmem [resolvable:$true] %s23
      %26 = dma.hbm_to_vmem [thread:$0]  %s0, 128, %s24, [#allocation3]
    $region5: #{tpu_custom_call.1} parent=1 // pred_fallthru
      _
    // Predicated region
    $region6: #{tpu_custom_call.1} parent=1 // pred_check
      _
    $region7: #{tpu_custom_call.1} parent=1 // pred_check_branch
      %28 = sbr.rel (0) target = $region9
    $region8: #{tpu_custom_call.1} parent=1 // pred_region
      _
    $region9: #{tpu_custom_call.1} parent=1 // pred_fallthru
      _
    // Predicated region
    $region10: #{tpu_custom_call.1} parent=1 // pred_check
      _
    $region11: #{tpu_custom_call.1} parent=1 // pred_check_branch
      %30 = sbr.rel (0) target = $region13
    $region12: #{tpu_custom_call.1} parent=1 // pred_region
      _
    $region13: #{tpu_custom_call.1} parent=1 // pred_fallthru
      _
    // Predicated region
    $region14: #{tpu_custom_call.1} parent=1 // pred_check
      _
    $region15: #{tpu_custom_call.1} parent=1 // pred_check_branch
      %32 = sbr.rel (0) target = $region17
    $region16: #{tpu_custom_call.1} parent=1 // pred_region
      _
    $region17: #{tpu_custom_call.1} parent=1 // pred_fallthru
      _
    // Predicated region
    $region18: #{tpu_custom_call.1} parent=1 // pred_check
      _
    $region19: #{tpu_custom_call.1} parent=1 // pred_check_branch
      %34 = sbr.rel (0) target = $region21
    $region20: #{tpu_custom_call.1} parent=1 // pred_region
      _
    $region21: #{tpu_custom_call.1} parent=1 // pred_fallthru
      _
    // Predicated region
    $region22: #{tpu_custom_call.1} parent=1 // pred_check
      _
    $region23: #{tpu_custom_call.1} parent=1 // pred_check_branch
      %36 = sbr.rel (0) target = $region25
    $region24: #{tpu_custom_call.1} parent=1 // pred_region
      _
    $region25: #{tpu_custom_call.1} parent=1 // pred_fallthru
      _
    // Predicated region
    $region26: #{tpu_custom_call.1} parent=1 // pred_check
      _
    $region27: #{tpu_custom_call.1} parent=1 // pred_check_branch
      %38 = sbr.rel (0) target = $region29
    $region28: #{tpu_custom_call.1} parent=1 // pred_region
      _
    $region29: #{tpu_custom_call.1} parent=1 // pred_fallthru
      _
    // Predicated region
    $region30: #{tpu_custom_call.1} parent=1 // pred_check
      _
    $region31: #{tpu_custom_call.1} parent=1 // pred_check_branch
      %40 = sbr.rel (0) target = $region33
    $region32: #{tpu_custom_call.1} parent=1 // pred_region
      _
    $region33: #{tpu_custom_call.1} parent=1 // pred_fallthru
      _
    // Predicated region
    $region34: #{tpu_custom_call.1} parent=1 // pred_check
      _
    $region35: #{tpu_custom_call.1} parent=1 // pred_check_branch
      %42 = sbr.rel (0) target = $region37
    $region36: #{tpu_custom_call.1} parent=1 // pred_region
      _
    $region37: #{tpu_custom_call.1} parent=1 // pred_fallthru
      _
    // Predicated region
    $region38: #{tpu_custom_call.1} parent=1 // pred_check
      _
    $region39: #{tpu_custom_call.1} parent=1 // pred_check_branch
      %44 = sbr.rel (0) target = $region41
    $region40: #{tpu_custom_call.1} parent=1 // pred_region
      _
    $region41: #{tpu_custom_call.1} parent=1 // pred_fallthru
      _
    // Predicated region
    $region42: #{tpu_custom_call.1} parent=1 // pred_check
      _
    $region43: #{tpu_custom_call.1} parent=1 // pred_check_branch
      %46 = sbr.rel (0) target = $region45
    $region44: #{tpu_custom_call.1} parent=1 // pred_region
      _
    $region45: #{tpu_custom_call.1} parent=1 // pred_fallthru
      _
    // Predicated region
    $region46: #{tpu_custom_call.1} parent=1 // pred_check
      _
    $region47: #{tpu_custom_call.1} parent=1 // pred_check_branch
      %48 = sbr.rel (0) target = $region49
    $region48: #{tpu_custom_call.1} parent=1 // pred_region
      %49 = dma.done [#allocation3], 128
    $region49: #{tpu_custom_call.1} parent=1 // pred_fallthru
      _
    %v50 = vld [vmem:[#allocation2] sm:$0xff]
    %v51 = vld [vmem:[%s2] sm:$0xff]
    %v52 = vld [vmem:[%s2 + $0x8] sm:$0xf]
    %v53 = vld [vmem:[%s1] sm:$0xff]
    %v54 = vld [vmem:[%s3] sm:$0xf]
    %vm55 = vcmask 31744
    %v57 = vsel %vm55, %v53, 0
    %vm59 = vcmask 1043456
    %v61 = vsel %vm59, %v54, 0
    %63 = vmatprep.subr.mxu0 0.0
    %64 = vmatpush1.msra.mxu0 %v61
    %65 = vmatprep.subr.mxu0 0.0
    %66 = vmatpush1.msra.mxu0 0.0
    %67 = vmatprep.subr.mxu0 0.0
    %68 = vmatpush1.msra.mxu0 0.0
    %69 = vmatprep.subr.mxu0 0.0
    %70 = vmatpush1.msra.mxu0 0.0
    %71 = vmatprep.subr.mxu0 0.0
    %72 = vmatpush1.msra.mxu0 0.0
    %73 = vmatprep.subr.mxu0 0.0
    %74 = vmatpush1.msra.mxu0 0.0
    %75 = vmatprep.subr.mxu0 0.0
    %76 = vmatpush1.msra.mxu0 0.0
    %77 = vmatprep.subr.mxu0 0.0
    %78 = vmatpush1.msra.mxu0 0.0
    %79 = vmatprep.subr.mxu0 0.0
    %80 = vmatpush1.msra.mxu0 0.0
    %81 = vmatprep.subr.mxu0 0.0
    %82 = vmatpush1.msra.mxu0 0.0
    %83 = vmatprep.subr.mxu0 0.0
    %84 = vmatpush1.msra.mxu0 0.0
    %85 = vmatprep.subr.mxu0 0.0
    %86 = vmatpush1.msra.mxu0 0.0
    %87 = vmatprep.subr.mxu0 0.0
    %88 = vmatpush1.msra.mxu0 0.0
    %89 = vmatprep.subr.mxu0 0.0
    %90 = vmatpush1.msra.mxu0 0.0
    %91 = vmatprep.subr.mxu0 0.0
    %92 = vmatpush1.msra.mxu0 0.0
    %93 = vmatprep.subr.mxu0 0.0
    %94 = vmatpush1.msra.mxu0 0.0
    %95 = vmatprep.subr.mxu0 0.0
    %96 = vmatpush1.msra.mxu0 0.0
    %97 = vmatprep.subr.mxu0 0.0
    %98 = vmatpush1.msra.mxu0 0.0
    %99 = vmatprep.subr.mxu0 0.0
    %100 = vmatpush1.msra.mxu0 0.0
    %101 = vmatprep.subr.mxu0 0.0
    %102 = vmatpush1.msra.mxu0 0.0
    %103 = vmatprep.subr.mxu0 0.0
    %104 = vmatpush1.msra.mxu0 0.0
    %105 = vmatprep.subr.mxu0 0.0
    %106 = vmatpush1.msra.mxu0 0.0
    %107 = vmatprep.subr.mxu0 0.0
    %108 = vmatpush1.msra.mxu0 0.0
    %109 = vmatprep.subr.mxu0 0.0
    %110 = vmatpush1.msra.mxu0 0.0
    %111 = vmatprep.subr.mxu0 0.0
    %112 = vmatpush1.msra.mxu0 0.0
    %113 = vmatprep.subr.mxu0 0.0
    %114 = vmatpush1.msra.mxu0 0.0
    %115 = vmatprep.subr.mxu0 0.0
    %116 = vmatpush1.msra.mxu0 0.0
    %117 = vmatprep.subr.mxu0 0.0
    %118 = vmatpush1.msra.mxu0 0.0
    %119 = vmatprep.subr.mxu0 0.0
    %120 = vmatpush1.msra.mxu0 0.0
    %121 = vmatprep.subr.mxu0 0.0
    %122 = vmatpush1.msra.mxu0 0.0
    %123 = vmatprep.subr.mxu0 0.0
    %124 = vmatpush1.msra.mxu0 0.0
    %125 = vmatprep.subr.mxu0 0.0
    %126 = vmatpush1.msra.mxu0 0.0
    %127 = vmatprep.mubr.f32.mxu0 0.0
    %128 = vmatmul.mubr.f32.gmra.mrb[0].mxu0 %v57
    %v129 = vpop.f32.mrb[0].mxu0
    %v130 = vadd.f32 0.0, %v129
    %v131 = vpop.f32.mrb[0].mxu0
    %132 = vdwg.mxu0
    %vm133 = vcmask 97280
    %v135 = vsel %vm133, %v50, 0
    %v138 = vsel %vm59, %v52, 0
    %140 = vmatprep.subr.mxu0 0.0
    %141 = vmatpush1.msra.mxu0 %v51
    %142 = vmatprep.subr.mxu0 0.0
    %143 = vmatpush1.msra.mxu0 %v138
    %144 = vmatprep.subr.mxu0 0.0
    %145 = vmatpush1.msra.mxu0 0.0
    %146 = vmatprep.subr.mxu0 0.0
    %147 = vmatpush1.msra.mxu0 0.0
    %148 = vmatprep.subr.mxu0 0.0
    %149 = vmatpush1.msra.mxu0 0.0
    %150 = vmatprep.subr.mxu0 0.0
    %151 = vmatpush1.msra.mxu0 0.0
    %152 = vmatprep.subr.mxu0 0.0
    %153 = vmatpush1.msra.mxu0 0.0
    %154 = vmatprep.subr.mxu0 0.0
    %155 = vmatpush1.msra.mxu0 0.0
    %156 = vmatprep.subr.mxu0 0.0
    %157 = vmatpush1.msra.mxu0 0.0
    %158 = vmatprep.subr.mxu0 0.0
    %159 = vmatpush1.msra.mxu0 0.0
    %160 = vmatprep.subr.mxu0 0.0
    %161 = vmatpush1.msra.mxu0 0.0
    %162 = vmatprep.subr.mxu0 0.0
    %163 = vmatpush1.msra.mxu0 0.0
    %164 = vmatprep.subr.mxu0 0.0
    %165 = vmatpush1.msra.mxu0 0.0
    %166 = vmatprep.subr.mxu0 0.0
    %167 = vmatpush1.msra.mxu0 0.0
    %168 = vmatprep.subr.mxu0 0.0
    %169 = vmatpush1.msra.mxu0 0.0
    %170 = vmatprep.subr.mxu0 0.0
    %171 = vmatpush1.msra.mxu0 0.0
    %172 = vmatprep.subr.mxu0 0.0
    %173 = vmatpush1.msra.mxu0 0.0
    %174 = vmatprep.subr.mxu0 0.0
    %175 = vmatpush1.msra.mxu0 0.0
    %176 = vmatprep.subr.mxu0 0.0
    %177 = vmatpush1.msra.mxu0 0.0
    %178 = vmatprep.subr.mxu0 0.0
    %179 = vmatpush1.msra.mxu0 0.0
    %180 = vmatprep.subr.mxu0 0.0
    %181 = vmatpush1.msra.mxu0 0.0
    %182 = vmatprep.subr.mxu0 0.0
    %183 = vmatpush1.msra.mxu0 0.0
    %184 = vmatprep.subr.mxu0 0.0
    %185 = vmatpush1.msra.mxu0 0.0
    %186 = vmatprep.subr.mxu0 0.0
    %187 = vmatpush1.msra.mxu0 0.0
    %188 = vmatprep.subr.mxu0 0.0
    %189 = vmatpush1.msra.mxu0 0.0
    %190 = vmatprep.subr.mxu0 0.0
    %191 = vmatpush1.msra.mxu0 0.0
    %192 = vmatprep.subr.mxu0 0.0
    %193 = vmatpush1.msra.mxu0 0.0
    %194 = vmatprep.subr.mxu0 0.0
    %195 = vmatpush1.msra.mxu0 0.0
    %196 = vmatprep.subr.mxu0 0.0
    %197 = vmatpush1.msra.mxu0 0.0
    %198 = vmatprep.subr.mxu0 0.0
    %199 = vmatpush1.msra.mxu0 0.0
    %200 = vmatprep.subr.mxu0 0.0
    %201 = vmatpush1.msra.mxu0 0.0
    %202 = vmatprep.subr.mxu0 0.0
    %203 = vmatpush1.msra.mxu0 0.0
    %204 = vmatprep.mubr.f32.mxu0 0.0
    %205 = vmatmul.mubr.f32.gmra.mrb[0].mxu0 %v135
    %v206 = vpop.f32.mrb[0].mxu0
    %v207 = vadd.f32 %v130, %v206
    %v208 = vpop.f32.mrb[0].mxu0
    %209 = vdwg.mxu0
    %v210 = vld [vmem:[%s4] sm:$0x1]
    %v212 = vlaneseq
    %v213 = vshrl.u32 %v212, 7
    %v214 = vsub.s32 0, %v213
    %v215 = vrot.slane %v210, %v214
    %v217 = vadd.f32 %v207, %v215
    %v218 = vmax.f32 %v217, 0.0
    %v219 = vld [vmem:[%s7] sm:$0x1]
    %v220 = vld [vmem:[%s5] sm:$0xff]
    %v221 = vld [vmem:[%s5 + $0x8] sm:$0xff]
    %v222 = vld [vmem:[%s5 + $0x10] sm:$0xff]
    %v223 = vld [vmem:[%s5 + $0x18] sm:$0xff]
    %v225 = vlaneseq
    %v226 = vshrl.u32 %v225, 7
    %v227 = vsub.s32 0, %v226
    %v228 = vrot.slane %v219, %v227
    %vm230 = vcmask 261120
    %v232 = vsel %vm230, %v218, 0
    %234 = vmatprep.subr.mxu0 0.0
    %235 = vmatpush1.msra.mxu0 %v220
    %236 = vmatprep.subr.mxu0 0.0
    %237 = vmatpush1.msra.mxu0 %v221
    %238 = vmatprep.subr.mxu0 0.0
    %239 = vmatpush1.msra.mxu0 %v222
    %240 = vmatprep.subr.mxu0 0.0
    %241 = vmatpush1.msra.mxu0 %v223
    %242 = vmatprep.subr.mxu0 0.0
    %243 = vmatpush1.msra.mxu0 0.0
    %244 = vmatprep.subr.mxu0 0.0
    %245 = vmatpush1.msra.mxu0 0.0
    %246 = vmatprep.subr.mxu0 0.0
    %247 = vmatpush1.msra.mxu0 0.0
    %248 = vmatprep.subr.mxu0 0.0
    %249 = vmatpush1.msra.mxu0 0.0
    %250 = vmatprep.subr.mxu0 0.0
    %251 = vmatpush1.msra.mxu0 0.0
    %252 = vmatprep.subr.mxu0 0.0
    %253 = vmatpush1.msra.mxu0 0.0
    %254 = vmatprep.subr.mxu0 0.0
    %255 = vmatpush1.msra.mxu0 0.0
    %256 = vmatprep.subr.mxu0 0.0
    %257 = vmatpush1.msra.mxu0 0.0
    %258 = vmatprep.subr.mxu0 0.0
    %259 = vmatpush1.msra.mxu0 0.0
    %260 = vmatprep.subr.mxu0 0.0
    %261 = vmatpush1.msra.mxu0 0.0
    %262 = vmatprep.subr.mxu0 0.0
    %263 = vmatpush1.msra.mxu0 0.0
    %264 = vmatprep.subr.mxu0 0.0
    %265 = vmatpush1.msra.mxu0 0.0
    %266 = vmatprep.subr.mxu0 0.0
    %267 = vmatpush1.msra.mxu0 0.0
    %268 = vmatprep.subr.mxu0 0.0
    %269 = vmatpush1.msra.mxu0 0.0
    %270 = vmatprep.subr.mxu0 0.0
    %271 = vmatpush1.msra.mxu0 0.0
    %272 = vmatprep.subr.mxu0 0.0
    %273 = vmatpush1.msra.mxu0 0.0
    %274 = vmatprep.subr.mxu0 0.0
    %275 = vmatpush1.msra.mxu0 0.0
    %276 = vmatprep.subr.mxu0 0.0
    %277 = vmatpush1.msra.mxu0 0.0
    %278 = vmatprep.subr.mxu0 0.0
    %279 = vmatpush1.msra.mxu0 0.0
    %280 = vmatprep.subr.mxu0 0.0
    %281 = vmatpush1.msra.mxu0 0.0
    %282 = vmatprep.subr.mxu0 0.0
    %283 = vmatpush1.msra.mxu0 0.0
    %284 = vmatprep.subr.mxu0 0.0
    %285 = vmatpush1.msra.mxu0 0.0
    %286 = vmatprep.subr.mxu0 0.0
    %287 = vmatpush1.msra.mxu0 0.0
    %288 = vmatprep.subr.mxu0 0.0
    %289 = vmatpush1.msra.mxu0 0.0
    %290 = vmatprep.subr.mxu0 0.0
    %291 = vmatpush1.msra.mxu0 0.0
    %292 = vmatprep.subr.mxu0 0.0
    %293 = vmatpush1.msra.mxu0 0.0
    %294 = vmatprep.subr.mxu0 0.0
    %295 = vmatpush1.msra.mxu0 0.0
    %296 = vmatprep.subr.mxu0 0.0
    %297 = vmatpush1.msra.mxu0 0.0
    %298 = vmatprep.mubr.f32.mxu0 0.0
    %299 = vmatmul.mubr.f32.gmra.mrb[0].mxu0 %v232
    %v300 = vpop.f32.mrb[0].mxu0
    %v301 = vadd.f32 %v228, %v300
    %v302 = vpop.f32.mrb[0].mxu0
    %303 = vdwg.mxu0
    %v304 = vmax.f32 %v301, 0.0
    %v305 = vld [vmem:[%s6] sm:$0xff]
    %v306 = vld [vmem:[%s6 + $0x8] sm:$0xff]
    %v307 = vld [vmem:[%s6 + $0x10] sm:$0xff]
    %v308 = vld [vmem:[%s6 + $0x18] sm:$0xff]
    %309 = vrot.lane.b32.xlu0 %v218, 96
    %v310 = vpop.permute.xlu0 %309
    %311 = vrot.lane.b32.xlu0 %v228, 96
    %v312 = vpop.permute.xlu0 %311
    %v314 = vsel %vm230, %v310, 0
    %316 = vmatprep.subr.mxu0 0.0
    %317 = vmatpush1.msra.mxu0 %v305
    %318 = vmatprep.subr.mxu0 0.0
    %319 = vmatpush1.msra.mxu0 %v306
    %320 = vmatprep.subr.mxu0 0.0
    %321 = vmatpush1.msra.mxu0 %v307
    %322 = vmatprep.subr.mxu0 0.0
    %323 = vmatpush1.msra.mxu0 %v308
    %324 = vmatprep.subr.mxu0 0.0
    %325 = vmatpush1.msra.mxu0 0.0
    %326 = vmatprep.subr.mxu0 0.0
    %327 = vmatpush1.msra.mxu0 0.0
    %328 = vmatprep.subr.mxu0 0.0
    %329 = vmatpush1.msra.mxu0 0.0
    %330 = vmatprep.subr.mxu0 0.0
    %331 = vmatpush1.msra.mxu0 0.0
    %332 = vmatprep.subr.mxu0 0.0
    %333 = vmatpush1.msra.mxu0 0.0
    %334 = vmatprep.subr.mxu0 0.0
    %335 = vmatpush1.msra.mxu0 0.0
    %336 = vmatprep.subr.mxu0 0.0
    %337 = vmatpush1.msra.mxu0 0.0
    %338 = vmatprep.subr.mxu0 0.0
    %339 = vmatpush1.msra.mxu0 0.0
    %340 = vmatprep.subr.mxu0 0.0
    %341 = vmatpush1.msra.mxu0 0.0
    %342 = vmatprep.subr.mxu0 0.0
    %343 = vmatpush1.msra.mxu0 0.0
    %344 = vmatprep.subr.mxu0 0.0
    %345 = vmatpush1.msra.mxu0 0.0
    %346 = vmatprep.subr.mxu0 0.0
    %347 = vmatpush1.msra.mxu0 0.0
    %348 = vmatprep.subr.mxu0 0.0
    %349 = vmatpush1.msra.mxu0 0.0
    %350 = vmatprep.subr.mxu0 0.0
    %351 = vmatpush1.msra.mxu0 0.0
    %352 = vmatprep.subr.mxu0 0.0
    %353 = vmatpush1.msra.mxu0 0.0
    %354 = vmatprep.subr.mxu0 0.0
    %355 = vmatpush1.msra.mxu0 0.0
    %356 = vmatprep.subr.mxu0 0.0
    %357 = vmatpush1.msra.mxu0 0.0
    %358 = vmatprep.subr.mxu0 0.0
    %359 = vmatpush1.msra.mxu0 0.0
    %360 = vmatprep.subr.mxu0 0.0
    %361 = vmatpush1.msra.mxu0 0.0
    %362 = vmatprep.subr.mxu0 0.0
    %363 = vmatpush1.msra.mxu0 0.0
    %364 = vmatprep.subr.mxu0 0.0
    %365 = vmatpush1.msra.mxu0 0.0
    %366 = vmatprep.subr.mxu0 0.0
    %367 = vmatpush1.msra.mxu0 0.0
    %368 = vmatprep.subr.mxu0 0.0
    %369 = vmatpush1.msra.mxu0 0.0
    %370 = vmatprep.subr.mxu0 0.0
    %371 = vmatpush1.msra.mxu0 0.0
    %372 = vmatprep.subr.mxu0 0.0
    %373 = vmatpush1.msra.mxu0 0.0
    %374 = vmatprep.subr.mxu0 0.0
    %375 = vmatpush1.msra.mxu0 0.0
    %376 = vmatprep.subr.mxu0 0.0
    %377 = vmatpush1.msra.mxu0 0.0
    %378 = vmatprep.subr.mxu0 0.0
    %379 = vmatpush1.msra.mxu0 0.0
    %380 = vmatprep.mubr.f32.mxu0 0.0
    %381 = vmatmul.mubr.f32.gmra.mrb[0].mxu0 %v314
    %v382 = vpop.f32.mrb[0].mxu0
    %v383 = vadd.f32 %v312, %v382
    %v384 = vpop.f32.mrb[0].mxu0
    %385 = vdwg.mxu0
    %v386 = vmax.f32 %v383, 0.0
    %v387 = vld [vmem:[%s8] sm:$0xff]
    %v388 = vld [vmem:[%s8 + $0x8] sm:$0xff]
    %v389 = vld [vmem:[%s8 + $0x10] sm:$0xff]
    %v390 = vld [vmem:[%s8 + $0x18] sm:$0xff]
    %v392 = vsel %vm230, %v304, 0
    %394 = vmatprep.subr.mxu0 0.0
    %395 = vmatpush1.msra.mxu0 %v387
    %396 = vmatprep.subr.mxu0 0.0
    %397 = vmatpush1.msra.mxu0 %v388
    %398 = vmatprep.subr.mxu0 0.0
    %399 = vmatpush1.msra.mxu0 %v389
    %400 = vmatprep.subr.mxu0 0.0
    %401 = vmatpush1.msra.mxu0 %v390
    %402 = vmatprep.subr.mxu0 0.0
    %403 = vmatpush1.msra.mxu0 0.0
    %404 = vmatprep.subr.mxu0 0.0
    %405 = vmatpush1.msra.mxu0 0.0
    %406 = vmatprep.subr.mxu0 0.0
    %407 = vmatpush1.msra.mxu0 0.0
    %408 = vmatprep.subr.mxu0 0.0
    %409 = vmatpush1.msra.mxu0 0.0
    %410 = vmatprep.subr.mxu0 0.0
    %411 = vmatpush1.msra.mxu0 0.0
    %412 = vmatprep.subr.mxu0 0.0
    %413 = vmatpush1.msra.mxu0 0.0
    %414 = vmatprep.subr.mxu0 0.0
    %415 = vmatpush1.msra.mxu0 0.0
    %416 = vmatprep.subr.mxu0 0.0
    %417 = vmatpush1.msra.mxu0 0.0
    %418 = vmatprep.subr.mxu0 0.0
    %419 = vmatpush1.msra.mxu0 0.0
    %420 = vmatprep.subr.mxu0 0.0
    %421 = vmatpush1.msra.mxu0 0.0
    %422 = vmatprep.subr.mxu0 0.0
    %423 = vmatpush1.msra.mxu0 0.0
    %424 = vmatprep.subr.mxu0 0.0
    %425 = vmatpush1.msra.mxu0 0.0
    %426 = vmatprep.subr.mxu0 0.0
    %427 = vmatpush1.msra.mxu0 0.0
    %428 = vmatprep.subr.mxu0 0.0
    %429 = vmatpush1.msra.mxu0 0.0
    %430 = vmatprep.subr.mxu0 0.0
    %431 = vmatpush1.msra.mxu0 0.0
    %432 = vmatprep.subr.mxu0 0.0
    %433 = vmatpush1.msra.mxu0 0.0
    %434 = vmatprep.subr.mxu0 0.0
    %435 = vmatpush1.msra.mxu0 0.0
    %436 = vmatprep.subr.mxu0 0.0
    %437 = vmatpush1.msra.mxu0 0.0
    %438 = vmatprep.subr.mxu0 0.0
    %439 = vmatpush1.msra.mxu0 0.0
    %440 = vmatprep.subr.mxu0 0.0
    %441 = vmatpush1.msra.mxu0 0.0
    %442 = vmatprep.subr.mxu0 0.0
    %443 = vmatpush1.msra.mxu0 0.0
    %444 = vmatprep.subr.mxu0 0.0
    %445 = vmatpush1.msra.mxu0 0.0
    %446 = vmatprep.subr.mxu0 0.0
    %447 = vmatpush1.msra.mxu0 0.0
    %448 = vmatprep.subr.mxu0 0.0
    %449 = vmatpush1.msra.mxu0 0.0
    %450 = vmatprep.subr.mxu0 0.0
    %451 = vmatpush1.msra.mxu0 0.0
    %452 = vmatprep.subr.mxu0 0.0
    %453 = vmatpush1.msra.mxu0 0.0
    %454 = vmatprep.subr.mxu0 0.0
    %455 = vmatpush1.msra.mxu0 0.0
    %456 = vmatprep.subr.mxu0 0.0
    %457 = vmatpush1.msra.mxu0 0.0
    %458 = vmatprep.mubr.f32.mxu0 0.0
    %459 = vmatmul.mubr.f32.gmra.mrb[0].mxu0 %v392
    %v460 = vpop.f32.mrb[0].mxu0
    %v461 = vadd.f32 0.0, %v460
    %v462 = vpop.f32.mrb[0].mxu0
    %463 = vdwg.mxu0
    %v464 = vld [vmem:[%s9] sm:$0xff]
    %v465 = vld [vmem:[%s9 + $0x8] sm:$0xff]
    %v466 = vld [vmem:[%s9 + $0x10] sm:$0xff]
    %v467 = vld [vmem:[%s9 + $0x18] sm:$0xff]
    %v469 = vsel %vm230, %v386, 0
    %471 = vmatprep.subr.mxu0 0.0
    %472 = vmatpush1.msra.mxu0 %v464
    %473 = vmatprep.subr.mxu0 0.0
    %474 = vmatpush1.msra.mxu0 %v465
    %475 = vmatprep.subr.mxu0 0.0
    %476 = vmatpush1.msra.mxu0 %v466
    %477 = vmatprep.subr.mxu0 0.0
    %478 = vmatpush1.msra.mxu0 %v467
    %479 = vmatprep.subr.mxu0 0.0
    %480 = vmatpush1.msra.mxu0 0.0
    %481 = vmatprep.subr.mxu0 0.0
    %482 = vmatpush1.msra.mxu0 0.0
    %483 = vmatprep.subr.mxu0 0.0
    %484 = vmatpush1.msra.mxu0 0.0
    %485 = vmatprep.subr.mxu0 0.0
    %486 = vmatpush1.msra.mxu0 0.0
    %487 = vmatprep.subr.mxu0 0.0
    %488 = vmatpush1.msra.mxu0 0.0
    %489 = vmatprep.subr.mxu0 0.0
    %490 = vmatpush1.msra.mxu0 0.0
    %491 = vmatprep.subr.mxu0 0.0
    %492 = vmatpush1.msra.mxu0 0.0
    %493 = vmatprep.subr.mxu0 0.0
    %494 = vmatpush1.msra.mxu0 0.0
    %495 = vmatprep.subr.mxu0 0.0
    %496 = vmatpush1.msra.mxu0 0.0
    %497 = vmatprep.subr.mxu0 0.0
    %498 = vmatpush1.msra.mxu0 0.0
    %499 = vmatprep.subr.mxu0 0.0
    %500 = vmatpush1.msra.mxu0 0.0
    %501 = vmatprep.subr.mxu0 0.0
    %502 = vmatpush1.msra.mxu0 0.0
    %503 = vmatprep.subr.mxu0 0.0
    %504 = vmatpush1.msra.mxu0 0.0
    %505 = vmatprep.subr.mxu0 0.0
    %506 = vmatpush1.msra.mxu0 0.0
    %507 = vmatprep.subr.mxu0 0.0
    %508 = vmatpush1.msra.mxu0 0.0
    %509 = vmatprep.subr.mxu0 0.0
    %510 = vmatpush1.msra.mxu0 0.0
    %511 = vmatprep.subr.mxu0 0.0
    %512 = vmatpush1.msra.mxu0 0.0
    %513 = vmatprep.subr.mxu0 0.0
    %514 = vmatpush1.msra.mxu0 0.0
    %515 = vmatprep.subr.mxu0 0.0
    %516 = vmatpush1.msra.mxu0 0.0
    %517 = vmatprep.subr.mxu0 0.0
    %518 = vmatpush1.msra.mxu0 0.0
    %519 = vmatprep.subr.mxu0 0.0
    %520 = vmatpush1.msra.mxu0 0.0
    %521 = vmatprep.subr.mxu0 0.0
    %522 = vmatpush1.msra.mxu0 0.0
    %523 = vmatprep.subr.mxu0 0.0
    %524 = vmatpush1.msra.mxu0 0.0
    %525 = vmatprep.subr.mxu0 0.0
    %526 = vmatpush1.msra.mxu0 0.0
    %527 = vmatprep.subr.mxu0 0.0
    %528 = vmatpush1.msra.mxu0 0.0
    %529 = vmatprep.subr.mxu0 0.0
    %530 = vmatpush1.msra.mxu0 0.0
    %531 = vmatprep.subr.mxu0 0.0
    %532 = vmatpush1.msra.mxu0 0.0
    %533 = vmatprep.subr.mxu0 0.0
    %534 = vmatpush1.msra.mxu0 0.0
    %535 = vmatprep.mubr.f32.mxu0 0.0
    %536 = vmatmul.mubr.f32.gmra.mrb[0].mxu0 %v469
    %v537 = vpop.f32.mrb[0].mxu0
    %v538 = vadd.f32 0.0, %v537
    %v539 = vpop.f32.mrb[0].mxu0
    %540 = vdwg.mxu0
    %542 = vrot.lane.b32.xlu0 %v538, 1
    %v543 = vpop.permute.xlu0 %542
    %vm545 = vcmask 7168
    %v546 = vsel %vm545, %v461, %v543
    %v547 = vld [vmem:[%s10] sm:$0x1]
    %v549 = vlaneseq
    %v550 = vshrl.u32 %v549, 7
    %v551 = vsub.s32 0, %v550
    %v552 = vrot.slane %v547, %v551
    %v554 = vadd.f32 %v546, %v552
    %vm555 = vcmask 15360
    %556 = vst.msk [vmem:[%s11] sm:$0xff] %vm555, %v554
    // Predicated region
    $region50: #{tpu_custom_call.1} parent=1 // pred_check
      _
    $region51: #{tpu_custom_call.1} parent=1 // pred_check_branch
      %558 = sbr.rel (0) target = $region53
    $region52: #{tpu_custom_call.1} parent=1 // pred_region
      _
    $region53: #{tpu_custom_call.1} parent=1 // pred_fallthru
      _
    // Predicated region
    $region54: #{tpu_custom_call.1} parent=1 // pred_check
      _
    $region55: #{tpu_custom_call.1} parent=1 // pred_check_branch
      %560 = sbr.rel (0) target = $region57
    $region56: #{tpu_custom_call.1} parent=1 // pred_region
      _
    $region57: #{tpu_custom_call.1} parent=1 // pred_fallthru
      _
    %561 = vsyncpa [#allocation3], 1

</llo_original>
